<compile_context>
chip_gen: v7x
topology: tpu7x:2x2x1
jax: 0.10.0
libtpu: 0.0.40
codegen_flags: <defaults>
</compile_context>

<pallas_src>
import functools
import math

import jax
import jax.numpy as jnp
import numpy as np
from jax.experimental import pallas as pl
from jax.experimental.pallas import tpu as pltpu


def _lightgcn_kernel(row_ref, col_ref, flag_ref,          # scalar prefetch (SMEM)
                     emb0_ref, graph_ref,                  # inputs (HBM / streamed VMEM)
                     out_ref,                              # output block (tm, Dp)
                     emb, out_acc, acc, dma_sem,           # scratch
                     *, n_layers, n_pad, tm, tk, compute_dtype):
    """Grid = (layer, scheduled nonzero tile).

    emb0_ref : [N_pad, Dp]   bf16, HBM (pl.ANY)  -- DMA'd once into `emb` slot 0
    graph_ref: [tm, tk]      bf16, streamed nonzero adjacency tile
    out_ref  : [tm, Dp]      f32 output block for the current row block
    emb      : [2*N_pad, Dp] bf16 VMEM ping-pong: e_l in half (l%2), e_{l+1} in other
    out_acc  : [N_pad, Dp]   f32 VMEM resident running layer mean
    acc      : [tm, Dp]      f32 VMEM per-row-block MXU accumulator
    """
    l = pl.program_id(0)          # layer index
    t = pl.program_id(1)          # position in the flattened nonzero-tile schedule

    flags = flag_ref[t]
    is_first = (flags & 1) != 0   # first scheduled tile of this row block
    is_last = (flags & 2) != 0    # last scheduled tile of this row block
    is_valid = (flags & 4) != 0   # real nonzero tile (dummy entries skip the matmul)

    scale = 1.0 / float(n_layers + 1)
    read_base = (l % 2) * n_pad          # e_l lives here
    write_base = ((l + 1) % 2) * n_pad   # e_{l+1} goes here (ping-pong, no copy)

    # One-time init: DMA e_0 (bf16, zero-padded) HBM -> VMEM slot 0, seed the mean.
    @pl.when((l == 0) & (t == 0))
    def _init():
        cp = pltpu.make_async_copy(emb0_ref, emb.at[pl.ds(0, n_pad), :], dma_sem.at[0])
        cp.start()
        cp.wait()
        out_acc[...] = emb[pl.ds(0, n_pad), :].astype(jnp.float32) * scale

    # Start of a row block: zero the f32 accumulator.
    @pl.when(is_first)
    def _zero_acc():
        acc[...] = jnp.zeros_like(acc)

    # MXU: (tm, tk) bf16 graph tile @ (tk, Dp) bf16 e_l tile -> f32 accumulate.
    @pl.when(is_valid)
    def _mxu():
        c_off = pl.multiple_of(read_base + col_ref[t] * tk, tk)
        acc[...] += jnp.dot(graph_ref[...], emb[pl.ds(c_off, tk), :],
                            preferred_element_type=jnp.float32)

    # End of a row block: emit e_{l+1} rows (bf16), fold this layer into the resident
    # running mean, and write the (partial) mean out -- the last layer's write is the
    # final answer, so no uninitialized VMEM is ever flushed to HBM.
    @pl.when(is_last)
    def _epilogue():
        r_off = pl.multiple_of(row_ref[t] * tm, tm)
        w_off = pl.multiple_of(write_base + row_ref[t] * tm, tm)
        emb[pl.ds(w_off, tm), :] = acc[...].astype(compute_dtype)
        new_mean = out_acc[pl.ds(r_off, tm), :] + scale * acc[...]
        out_acc[pl.ds(r_off, tm), :] = new_mean
        out_ref[...] = new_mean


def _round_up(x, m):
    return ((x + m - 1) // m) * m


def _pick_vmem_limit():
    """3/4 of physical VMEM (>= headroom for Mosaic scratch), capped at 112 MiB."""
    try:
        cap = pltpu.get_tpu_info().vmem_capacity_bytes
    except Exception:
        cap = 64 * 1024 * 1024          # conservative default (v7x-sized)
    return int(min((cap * 3) // 4, 112 * 1024 * 1024))


def _build_schedule(tile_nz):
    """Flatten the (row_blk, col_blk) nonzero mask into a row-sorted schedule.

    flags bit0 = first tile of its row block, bit1 = last, bit2 = valid (nonzero).
    Empty row blocks (padding / isolated blocks) get one dummy entry (valid off) so
    their e_{l+1} rows are written as exact zeros.
    """
    nb_r, _ = tile_nz.shape
    rows, cols, flags = [], [], []
    for r in range(nb_r):
        nz = np.nonzero(tile_nz[r])[0]
        if nz.size == 0:
            nz, valid = np.array([0]), 0
        else:
            valid = 4
        n = nz.size
        for j, c in enumerate(nz):
            f = valid | (1 if j == 0 else 0) | (2 if j == n - 1 else 0)
            rows.append(r)
            cols.append(int(c))
            flags.append(f)
    return (np.asarray(rows, np.int32), np.asarray(cols, np.int32),
            np.asarray(flags, np.int32))


def lightgcn_propagate(graph, emb0, *, n_layers=3, tm=256, tk=2048,
                       compute_dtype=jnp.bfloat16):
    """Runs n_layers of e <- G @ e and returns mean(e_0..e_L) as f32 [N, D]."""
    N, D = emb0.shape
    assert graph.shape == (N, N)
    assert n_layers >= 1

    # Lane-dense latent dim (pad 64 -> 128); (8,128)-aligned tiles; N padded to lcm.
    Dp = _round_up(max(D, 128), 128)
    tm = min(tm, _round_up(N, 128))
    tk = min(tk, _round_up(N, 128))
    N_pad = _round_up(N, math.lcm(tm, tk))
    nb_r, nb_c = N_pad // tm, N_pad // tk

    # Zero-padding is exact: padded rows/cols of G and padded lanes of emb are zero,
    # never perturb real rows, and are sliced off at the end.
    graph_p = jnp.zeros((N_pad, N_pad), compute_dtype).at[:N, :N].set(
        graph.astype(compute_dtype))
    emb0_p = jnp.zeros((N_pad, Dp), compute_dtype).at[:N, :D].set(
        emb0.astype(compute_dtype))

    # Block-level nonzero mask of the padded adjacency -> flattened tile schedule.
    tile_nz = np.asarray(jax.device_get(
        (graph_p != 0).reshape(nb_r, tm, nb_c, tk).any(axis=(1, 3))))
    sched_rows, sched_cols, sched_flags = _build_schedule(tile_nz)
    n_sched = int(sched_rows.shape[0])

    kernel = functools.partial(
        _lightgcn_kernel, n_layers=n_layers, n_pad=N_pad, tm=tm, tk=tk,
        compute_dtype=compute_dtype)

    # index_maps receive (layer, sched_step, *prefetch_refs).
    graph_idx = lambda l, t, rows, cols, flags: (rows[t], cols[t])
    out_idx = lambda l, t, rows, cols, flags: (rows[t], 0)

    def _call(graph_buffers):
        if graph_buffers is None:
            graph_spec = pl.BlockSpec((tm, tk), graph_idx)
        else:
            try:
                graph_spec = pl.BlockSpec((tm, tk), graph_idx,
                                          pipeline_mode=pl.Buffered(graph_buffers))
            except (TypeError, AttributeError):
                graph_spec = pl.BlockSpec((tm, tk), graph_idx)
        return pl.pallas_call(
            kernel,
            out_shape=jax.ShapeDtypeStruct((N_pad, Dp), jnp.float32),
            grid_spec=pltpu.PrefetchScalarGridSpec(
                num_scalar_prefetch=3,
                grid=(n_layers, n_sched),
                in_specs=[
                    # e_0 stays in HBM; one-time manual DMA into the ping-pong scratch.
                    pl.BlockSpec(memory_space=pl.ANY),
                    # Nonzero bf16 adjacency tiles, streamed via the prefetched schedule.
                    graph_spec,
                ],
                # Lane-dense per-row-block output, written from each row-block epilogue.
                out_specs=pl.BlockSpec((tm, Dp), out_idx),
                scratch_shapes=[
                    pltpu.VMEM((2 * N_pad, Dp), compute_dtype),   # e_l / e_{l+1} ping-pong
                    pltpu.VMEM((N_pad, Dp), jnp.float32),         # resident running mean
                    pltpu.VMEM((tm, Dp), jnp.float32),            # per-row-block MXU acc
                    pltpu.SemaphoreType.DMA((1,)),                # one-time e_0 DMA sem
                ],
            ),
            compiler_params=pltpu.CompilerParams(
                # Layer axis is sequentially dependent and the resident emb/mean scratch
                # is shared across row blocks, so both axes stay serialized.
                dimension_semantics=("arbitrary", "arbitrary"),
                vmem_limit_bytes=_pick_vmem_limit(),
            ),
        )(jnp.asarray(sched_rows), jnp.asarray(sched_cols), jnp.asarray(sched_flags),
          emb0_p, graph_p)

    try:
        out = _call(3)            # 3-deep buffering on the dominant graph stream
    except Exception:             # fallback: default double-buffering
        out = _call(None)

    return out[:N, :D]


def lightgcn_forward(graph, user_emb, item_emb, *, n_layers=3, tm=256, tk=2048):
    """Pallas equivalent of LightGCN.forward(): returns (user_out, item_out)."""
    user_num = user_emb.shape[0]
    emb0 = jnp.concatenate([user_emb, item_emb], axis=0)
    light_out = lightgcn_propagate(graph, emb0, n_layers=n_layers, tm=tm, tk=tk)
    return light_out[:user_num], light_out[user_num:]


def _lightgcn_ref(graph, emb0, n_layers):
    """Reference mirroring the kernel's numerics (bf16 graph / bf16 e_l, f32 MXU
    accumulation, mean folded as 1/(L+1) scaling)."""
    scale = 1.0 / float(n_layers + 1)
    g = graph.astype(jnp.bfloat16)
    e = emb0.astype(jnp.bfloat16)
    out = e.astype(jnp.float32) * scale
    for _ in range(n_layers):
        acc = jnp.dot(g, e, preferred_element_type=jnp.float32)
        out = out + scale * acc
        e = acc.astype(jnp.bfloat16)
    return out


if __name__ == "__main__":
    key = jax.random.PRNGKey(0)
    user_num, item_num, latent_dim, n_layers = 200, 120, 64, 3
    N = user_num + item_num

    ku, ki, kg = jax.random.split(key, 3)
    user_emb = 0.1 * jax.random.normal(ku, (user_num, latent_dim), jnp.float32)
    item_emb = 0.1 * jax.random.normal(ki, (item_num, latent_dim), jnp.float32)

    # Small symmetric-normalized bipartite adjacency (what `graph` holds in the
    # PyTorch module): A = [[0, R], [R^T, 0]], G = D^-1/2 A D^-1/2.
    r = (jax.random.uniform(kg, (user_num, item_num)) < 0.05).astype(jnp.float32)
    adj = jnp.zeros((N, N), jnp.float32)
    adj = adj.at[:user_num, user_num:].set(r)
    adj = adj.at[user_num:, :user_num].set(r.T)
    deg = jnp.maximum(adj.sum(axis=1), 1.0)
    d_inv_sqrt = 1.0 / jnp.sqrt(deg)
    graph = adj * d_inv_sqrt[:, None] * d_inv_sqrt[None, :]

    # Small shapes -> tm=tk=128 so the run exercises the multi-tile schedule, the
    # nonzero-tile skipping (user-user and item-item blocks are empty), and the
    # per-row-block epilogues.
    user_out, item_out = lightgcn_forward(graph, user_emb, item_emb,
                                          n_layers=n_layers, tm=128, tk=128)
    user_out, item_out = jax.block_until_ready((user_out, item_out))

    ref = _lightgcn_ref(graph, jnp.concatenate([user_emb, item_emb], axis=0), n_layers)
    ref_u, ref_i = ref[:user_num], ref[user_num:]
    max_err = max(float(jnp.max(jnp.abs(user_out - ref_u))),
                  float(jnp.max(jnp.abs(item_out - ref_i))))
    assert max_err < 2e-3, f"LightGCN kernel mismatch vs reference: max abs err {max_err}"

    print("KERNEL_OK")
</pallas_src>

<mosaic_0001>
module attributes {stable_mosaic.version = 11 : i64} {
  func.func @_lightgcn_kernel(%arg0: i32, %arg1: i32, %arg2: memref<7xi32, #tpu.memory_space<smem>>, %arg3: memref<7xi32, #tpu.memory_space<smem>>, %arg4: memref<7xi32, #tpu.memory_space<smem>>, %arg5: memref<384x128xbf16, #tpu.memory_space<any>>, %arg6: memref<128x128xbf16, #tpu.memory_space<vmem>>, %arg7: memref<128x128xf32, #tpu.memory_space<vmem>>, %arg8: memref<768x128xbf16, #tpu.memory_space<vmem>>, %arg9: memref<384x128xf32, #tpu.memory_space<vmem>>, %arg10: memref<128x128xf32, #tpu.memory_space<vmem>>, %arg11: memref<1x!tpu.dma_semaphore, #tpu.memory_space<semaphore_mem>>) attributes {dimension_semantics = [#tpu.dimension_semantics<arbitrary>, #tpu.dimension_semantics<arbitrary>], iteration_bounds = array<i64: 3, 7>, scalar_prefetch = 3 : i64, scratch_operands = 4 : i64, tpu.core_type = #tpu.core_type<tc>, window_params = [{}, {transform_indices = @transform_1, window_bounds = array<i64: 128, 128>}, {transform_indices = @transform_2, window_bounds = array<i64: 128, 128>}]} {
    %0 = arith.index_cast %arg1 : i32 to index
    %1 = memref.load %arg4[%0] : memref<7xi32, #tpu.memory_space<smem>>
    %c1_i32 = arith.constant 1 : i32
    %2 = arith.andi %1, %c1_i32 : i32
    %c0_i32 = arith.constant 0 : i32
    %3 = arith.cmpi ne, %2, %c0_i32 : i32
    %c2_i32 = arith.constant 2 : i32
    %4 = arith.andi %1, %c2_i32 : i32
    %c0_i32_0 = arith.constant 0 : i32
    %5 = arith.cmpi ne, %4, %c0_i32_0 : i32
    %c4_i32 = arith.constant 4 : i32
    %6 = arith.andi %1, %c4_i32 : i32
    %c0_i32_1 = arith.constant 0 : i32
    %7 = arith.cmpi ne, %6, %c0_i32_1 : i32
    %c2_i32_2 = arith.constant 2 : i32
    %c0_i32_3 = arith.constant 0 : i32
    %8 = arith.cmpi eq, %c2_i32_2, %c0_i32_3 : i32
    %c1_i32_4 = arith.constant 1 : i32
    %9 = arith.select %8, %c1_i32_4, %c2_i32_2 : i32
    %10 = arith.remsi %arg0, %9 : i32
    %c0_i32_5 = arith.constant 0 : i32
    %11 = arith.cmpi ne, %10, %c0_i32_5 : i32
    %c0_i32_6 = arith.constant 0 : i32
    %12 = arith.cmpi slt, %10, %c0_i32_6 : i32
    %c0_i32_7 = arith.constant 0 : i32
    %13 = arith.cmpi slt, %9, %c0_i32_7 : i32
    %14 = arith.xori %12, %13 : i1
    %15 = arith.andi %14, %11 : i1
    %16 = arith.addi %10, %9 : i32
    %17 = arith.select %15, %16, %10 : i32
    %c384_i32 = arith.constant 384 : i32
    %18 = arith.muli %17, %c384_i32 : i32
    %c1_i32_8 = arith.constant 1 : i32
    %19 = arith.addi %arg0, %c1_i32_8 : i32
    %c2_i32_9 = arith.constant 2 : i32
    %c0_i32_10 = arith.constant 0 : i32
    %20 = arith.cmpi eq, %c2_i32_9, %c0_i32_10 : i32
    %c1_i32_11 = arith.constant 1 : i32
    %21 = arith.select %20, %c1_i32_11, %c2_i32_9 : i32
    %22 = arith.remsi %19, %21 : i32
    %c0_i32_12 = arith.constant 0 : i32
    %23 = arith.cmpi ne, %22, %c0_i32_12 : i32
    %c0_i32_13 = arith.constant 0 : i32
    %24 = arith.cmpi slt, %22, %c0_i32_13 : i32
    %c0_i32_14 = arith.constant 0 : i32
    %25 = arith.cmpi slt, %21, %c0_i32_14 : i32
    %26 = arith.xori %24, %25 : i1
    %27 = arith.andi %26, %23 : i1
    %28 = arith.addi %22, %21 : i32
    %29 = arith.select %27, %28, %22 : i32
    %c384_i32_15 = arith.constant 384 : i32
    %30 = arith.muli %29, %c384_i32_15 : i32
    %c0_i32_16 = arith.constant 0 : i32
    %31 = arith.cmpi eq, %arg0, %c0_i32_16 : i32
    %c0_i32_17 = arith.constant 0 : i32
    %32 = arith.cmpi eq, %arg1, %c0_i32_17 : i32
    %33 = arith.andi %31, %32 : i1
    %34 = arith.extui %33 : i1 to i32
    %c0_i32_18 = arith.constant 0 : i32
    %35 = arith.cmpi ne, %34, %c0_i32_18 : i32
    scf.if %35 {
      %c0_i32_22 = arith.constant 0 : i32
      %c0_i32_23 = arith.constant 0 : i32
      %c0_i32_24 = arith.constant 0 : i32
      %42 = tpu.memref_slice %arg8[%c0_i32_23, %c0_i32_24] : memref<768x128xbf16, #tpu.memory_space<vmem>> -> memref<384x128xbf16, #tpu.memory_space<vmem>>
      %43 = tpu.memref_slice %arg11[%c0_i32_22] : memref<1x!tpu.dma_semaphore, #tpu.memory_space<semaphore_mem>> -> memref<1x!tpu.dma_semaphore, #tpu.memory_space<semaphore_mem>>
      %44 = tpu.memref_squeeze %43 : memref<1x!tpu.dma_semaphore, #tpu.memory_space<semaphore_mem>> -> memref<!tpu.dma_semaphore, #tpu.memory_space<semaphore_mem>>
      tpu.enqueue_dma source(%arg5 : memref<384x128xbf16, #tpu.memory_space<any>>) target(%42 : memref<384x128xbf16, #tpu.memory_space<vmem>>) target_semaphore(%44 : memref<!tpu.dma_semaphore, #tpu.memory_space<semaphore_mem>>)
      %c0_i32_25 = arith.constant 0 : i32
      %c0_i32_26 = arith.constant 0 : i32
      %c0_i32_27 = arith.constant 0 : i32
      %45 = tpu.memref_slice %arg8[%c0_i32_26, %c0_i32_27] : memref<768x128xbf16, #tpu.memory_space<vmem>> -> memref<384x128xbf16, #tpu.memory_space<vmem>>
      %46 = tpu.memref_slice %arg11[%c0_i32_25] : memref<1x!tpu.dma_semaphore, #tpu.memory_space<semaphore_mem>> -> memref<1x!tpu.dma_semaphore, #tpu.memory_space<semaphore_mem>>
      %47 = tpu.memref_squeeze %46 : memref<1x!tpu.dma_semaphore, #tpu.memory_space<semaphore_mem>> -> memref<!tpu.dma_semaphore, #tpu.memory_space<semaphore_mem>>
      tpu.wait_dma2 semaphore(%47 : memref<!tpu.dma_semaphore, #tpu.memory_space<semaphore_mem>>) src(%arg5 : memref<384x128xbf16, #tpu.memory_space<any>>) dst(%45 : memref<384x128xbf16, #tpu.memory_space<vmem>>)
      %c0 = arith.constant 0 : index
      %c0_28 = arith.constant 0 : index
      %48 = vector.load %arg8[%c0, %c0_28] : memref<768x128xbf16, #tpu.memory_space<vmem>>, vector<384x128xbf16>
      %49 = arith.extf %48 : vector<384x128xbf16> to vector<384x128xf32>
      %cst = arith.constant 2.500000e-01 : f32
      %50 = vector.broadcast %cst : f32 to vector<384x128xf32>
      %51 = arith.mulf %49, %50 : vector<384x128xf32>
      %c0_29 = arith.constant 0 : index
      %c0_30 = arith.constant 0 : index
      %52 = vector.load %arg9[%c0_29, %c0_30] : memref<384x128xf32, #tpu.memory_space<vmem>>, vector<384x128xf32>
      tpu.vector_store %arg9[%c0_29, %c0_30], %51 {strides = array<i32>} : memref<384x128xf32, #tpu.memory_space<vmem>>, vector<384x128xf32>,
    } else {
    }
    %36 = arith.extui %3 : i1 to i32
    %c0_i32_19 = arith.constant 0 : i32
    %37 = arith.cmpi ne, %36, %c0_i32_19 : i32
    scf.if %37 {
      %cst = arith.constant 0.000000e+00 : f32
      %42 = vector.broadcast %cst : f32 to vector<128x128xf32>
      %c0 = arith.constant 0 : index
      %c0_22 = arith.constant 0 : index
      %43 = vector.load %arg10[%c0, %c0_22] : memref<128x128xf32, #tpu.memory_space<vmem>>, vector<128x128xf32>
      tpu.vector_store %arg10[%c0, %c0_22], %42 {strides = array<i32>} : memref<128x128xf32, #tpu.memory_space<vmem>>, vector<128x128xf32>,
    } else {
    }
    %38 = arith.extui %7 : i1 to i32
    %c0_i32_20 = arith.constant 0 : i32
    %39 = arith.cmpi ne, %38, %c0_i32_20 : i32
    scf.if %39 {
      %42 = arith.index_cast %arg1 : i32 to index
      %43 = memref.load %arg3[%42] : memref<7xi32, #tpu.memory_space<smem>>
      %c128_i32 = arith.constant 128 : i32
      %44 = arith.muli %43, %c128_i32 : i32
      %45 = arith.addi %18, %44 : i32
      %46 = tpu.assume_multiple %45, 128 : i32
      %c0 = arith.constant 0 : index
      %c0_22 = arith.constant 0 : index
      %47 = vector.load %arg10[%c0, %c0_22] : memref<128x128xf32, #tpu.memory_space<vmem>>, vector<128x128xf32>
      %c0_23 = arith.constant 0 : index
      %c0_24 = arith.constant 0 : index
      %48 = vector.load %arg6[%c0_23, %c0_24] : memref<128x128xbf16, #tpu.memory_space<vmem>>, vector<128x128xbf16>
      %49 = arith.index_cast %46 : i32 to index
      %c0_25 = arith.constant 0 : index
      %50 = vector.load %arg8[%49, %c0_25] : memref<768x128xbf16, #tpu.memory_space<vmem>>, vector<128x128xbf16>
      %cst = arith.constant dense<0.000000e+00> : vector<128x128xf32>
      %51 = tpu.matmul %48, %50, %cst {dimension_numbers = #tpu.dot_dimension_numbers<[1], [0], [0], [1], [0, 0, 1, 1], [], []>} : vector<128x128xbf16>, vector<128x128xbf16>, vector<128x128xf32> -> vector<128x128xf32>
      %52 = arith.addf %47, %51 : vector<128x128xf32>
      %c0_26 = arith.constant 0 : index
      %c0_27 = arith.constant 0 : index
      %53 = vector.load %arg10[%c0_26, %c0_27] : memref<128x128xf32, #tpu.memory_space<vmem>>, vector<128x128xf32>
      tpu.vector_store %arg10[%c0_26, %c0_27], %52 {strides = array<i32>} : memref<128x128xf32, #tpu.memory_space<vmem>>, vector<128x128xf32>,
    } else {
    }
    %40 = arith.extui %5 : i1 to i32
    %c0_i32_21 = arith.constant 0 : i32
    %41 = arith.cmpi ne, %40, %c0_i32_21 : i32
    scf.if %41 {
      %42 = arith.index_cast %arg1 : i32 to index
      %43 = memref.load %arg2[%42] : memref<7xi32, #tpu.memory_space<smem>>
      %c128_i32 = arith.constant 128 : i32
      %44 = arith.muli %43, %c128_i32 : i32
      %45 = tpu.assume_multiple %44, 128 : i32
      %46 = arith.index_cast %arg1 : i32 to index
      %47 = memref.load %arg2[%46] : memref<7xi32, #tpu.memory_space<smem>>
      %c128_i32_22 = arith.constant 128 : i32
      %48 = arith.muli %47, %c128_i32_22 : i32
      %49 = arith.addi %30, %48 : i32
      %50 = tpu.assume_multiple %49, 128 : i32
      %c0 = arith.constant 0 : index
      %c0_23 = arith.constant 0 : index
      %51 = vector.load %arg10[%c0, %c0_23] : memref<128x128xf32, #tpu.memory_space<vmem>>, vector<128x128xf32>
      %52 = arith.truncf %51 : vector<128x128xf32> to vector<128x128xbf16>
      %53 = arith.index_cast %50 : i32 to index
      %c0_24 = arith.constant 0 : index
      %54 = vector.load %arg8[%53, %c0_24] : memref<768x128xbf16, #tpu.memory_space<vmem>>, vector<128x128xbf16>
      tpu.vector_store %arg8[%53, %c0_24], %52 {strides = array<i32>} : memref<768x128xbf16, #tpu.memory_space<vmem>>, vector<128x128xbf16>,
      %55 = arith.index_cast %45 : i32 to index
      %c0_25 = arith.constant 0 : index
      %56 = vector.load %arg9[%55, %c0_25] : memref<384x128xf32, #tpu.memory_space<vmem>>, vector<128x128xf32>
      %c0_26 = arith.constant 0 : index
      %c0_27 = arith.constant 0 : index
      %57 = vector.load %arg10[%c0_26, %c0_27] : memref<128x128xf32, #tpu.memory_space<vmem>>, vector<128x128xf32>
      %cst = arith.constant 2.500000e-01 : f32
      %58 = vector.broadcast %cst : f32 to vector<128x128xf32>
      %59 = arith.mulf %58, %57 : vector<128x128xf32>
      %60 = arith.addf %56, %59 : vector<128x128xf32>
      %61 = arith.index_cast %45 : i32 to index
      %c0_28 = arith.constant 0 : index
      %62 = vector.load %arg9[%61, %c0_28] : memref<384x128xf32, #tpu.memory_space<vmem>>, vector<128x128xf32>
      tpu.vector_store %arg9[%61, %c0_28], %60 {strides = array<i32>} : memref<384x128xf32, #tpu.memory_space<vmem>>, vector<128x128xf32>,
      %c0_29 = arith.constant 0 : index
      %c0_30 = arith.constant 0 : index
      %63 = vector.load %arg7[%c0_29, %c0_30] : memref<128x128xf32, #tpu.memory_space<vmem>>, vector<128x128xf32>
      tpu.vector_store %arg7[%c0_29, %c0_30], %60 {strides = array<i32>} : memref<128x128xf32, #tpu.memory_space<vmem>>, vector<128x128xf32>,
    } else {
    }
    return
  }
  func.func @transform_1(%arg0: i32, %arg1: i32, %arg2: memref<7xi32, #tpu.memory_space<smem>>, %arg3: memref<7xi32, #tpu.memory_space<smem>>, %arg4: memref<7xi32, #tpu.memory_space<smem>>) -> (i32, i32) {
    %0 = arith.index_cast %arg1 : i32 to index
    %1 = memref.load %arg2[%0] : memref<7xi32, #tpu.memory_space<smem>>
    %2 = arith.index_cast %arg1 : i32 to index
    %3 = memref.load %arg3[%2] : memref<7xi32, #tpu.memory_space<smem>>
    %c0_i32 = arith.constant 0 : i32
    return %1, %3 : i32, i32
  }
  func.func @transform_2(%arg0: i32, %arg1: i32, %arg2: memref<7xi32, #tpu.memory_space<smem>>, %arg3: memref<7xi32, #tpu.memory_space<smem>>, %arg4: memref<7xi32, #tpu.memory_space<smem>>) -> (i32, i32) {
    %0 = arith.index_cast %arg1 : i32 to index
    %1 = memref.load %arg2[%0] : memref<7xi32, #tpu.memory_space<smem>>
    %c0_i32 = arith.constant 0 : i32
    %c0_i32_0 = arith.constant 0 : i32
    return %1, %c0_i32 : i32, i32
  }
}

</mosaic_0001>

<llo_original>
// kernel: tpu_custom_call.1
$region0: #{tpu_custom_call.1}
  #allocation0 [shape = 'u32[]', space=smem, size = 0x4, offset = 0x4, fixed_abs, tag = 'smem constant byte address 0x4 - core index']
  #allocation1 [shape = 'u32[144,128]{1,0:T(1,128)}', space=vmem, size = 0x12000, scoped, tag = 'internal scratch']
  #allocation2 [shape = 'bf16[768,128]{1,0:T(16,128)(2,1)}', space=vmem, size = 0x30000, scoped, tag = 'scratch operand']
  #allocation3 [shape = 'f32[384,128]{1,0:T(8,128)}', space=vmem, size = 0x30000, scoped, tag = 'scratch operand']
  #allocation4 [shape = 'f32[128,128]{1,0:T(8,128)}', space=vmem, size = 0x10000, scoped, tag = 'scratch operand']
  #allocation5 [shape = 's32[1]{0}', space=sflag, size = 0x4, scoped, tag = 'scratch operand']
  #allocation6 [shape = 's32[1]{0}', space=sflag, size = 0x4, scoped, tag = 'scoped memory for tpu_custom_call.1']
  #allocation7 [shape = 'u8[512]{0}', space=smem, size = 0x200, scoped, tag = 'prefetched SMEM operand 0']
  #allocation8 [shape = 'u8[512]{0}', space=smem, size = 0x200, scoped, tag = 'prefetched SMEM operand 1']
  #allocation9 [shape = 'u8[512]{0}', space=smem, size = 0x200, scoped, tag = 'prefetched SMEM operand 2']
  #allocation14 [shape = 's32[]', space=sflag, size = 0x4, offset = 0, fixed_abs, tag = 'sflag constant byte address 0x0 - dummy sync flag']
  #allocation15 [shape = 's32[]', space=sflag, size = 0x4, offset = 0, fixed_abs, tag = 'sflag constant byte address 0x0 - dummy sync flag']
  #allocation16 [shape = 'u32[]', space=smem, size = 0x4, offset = 0x44, fixed_abs, tag = 'smem constant byte address 0x44 - assertion arg 0']
  #allocation17 [shape = 'u32[]', space=smem, size = 0x4, offset = 0x48, fixed_abs, tag = 'smem constant byte address 0x48 - assertion arg 1']
  %s0 = inlined_call_operand.hbm [shape: s32[7], index: 0, kind: input, shape index: {}]
  %s1 = inlined_call_operand.vmem [shape: s32[7], index: 1, kind: input, shape index: {}]
  %s2 = inlined_call_operand.vmem [shape: s32[7], index: 2, kind: input, shape index: {}]
  %s3 = inlined_call_operand.hbm [shape: bf16[384,128], index: 3, kind: input, shape index: {}]
  %s4 = inlined_call_operand.hbm [shape: bf16[384,384], index: 4, kind: input, shape index: {}]
  %s5 = inlined_call_operand.hbm [shape: f32[384,128], index: 5, kind: output, shape index: {}]
  %s6 = sld [smem:[#allocation0]]
  $region61: #{tpu_custom_call.1} parent=0
    _
  %s8 = ssub.s32 1, %s6
  %s9 = scalar_select 0, %s8, %s6
  %11 = dma.hbm_to_smem %s0, 16, [#allocation7], [#allocation6]
  %s12 = sshll.u32 %s1, 4
  %s13 = int_to_ptr.vmem [resolvable:$true] %s12
  %15 = dma.vmem_to_smem %s13, 16, [#allocation8], [#allocation6]
  %s16 = sshll.u32 %s2, 4
  %s17 = int_to_ptr.vmem [resolvable:$true] %s16
  %19 = dma.vmem_to_smem %s17, 16, [#allocation9], [#allocation6]
  %20 = dma.done [#allocation6], 48
  %21 = sfence
  $region1: #{tpu_custom_call.1} parent=0
    #allocation10 [shape = 'u8[65536]{0}', space=vmem, size = 0x10000, scoped, tag = 'input window, operand 4']
    #allocation11 [shape = 's32[2]{0}', space=sflag, size = 0x8, scoped, tag = 'scoped memory for tpu_custom_call.1']
    #allocation12 [shape = 's32[2]{0}', space=sflag, size = 0x8, scoped, tag = 'scoped memory for tpu_custom_call.1']
    #allocation13 [shape = 'u8[131072]{0}', space=vmem, size = 0x20000, scoped, tag = 'output window, operand 0']
    %22 = vsyncpa [#allocation11], 0
    %s23 = scalar_lea.sflag [#allocation11], 1
    %24 = vsyncpa %s23, 0
    %25 = vsyncpa [#allocation12], 0
    %s26 = scalar_lea.sflag [#allocation12], 1
    %27 = vsyncpa %s26, 0
    loop: start=0, step=1, limit=23
    $region2: #{tpu_custom_call.1} parent=1 // loop_pre_header
      _
    $region3: #{tpu_custom_call.1} parent=1 // loop_header
      %s29 = sphi 0, %s33
      %p30 = scmp.ge.s32.totalorder %s29, 23
      %s36 = sphi 0, %s48
      %s37 = sphi 0, %s44
      %s38 = sphi 0, %s36
      %s39 = sphi 0, %s37
      %s40 = sphi 0, %s38
      %s41 = sphi 0, %s39
      %s57 = sphi 0, %s59
      %s60 = sphi 0, %s57
      %s61 = sphi 0, %s60
      %s77 = sphi 0, %s61
      %s85 = sphi 0, %s87
      %s88 = sphi 0, %s85
      %s89 = sphi 0, %s88
      %s105 = sphi 0, %s89
    $region4: #{tpu_custom_call.1} parent=1 // loop_header_branch
      %32 = sbr.rel (%p30) target = $region8
    $region5: #{tpu_custom_call.1} parent=1 // loop_body
      %s34 = ssub.s32 %s29, 1
      %s35 = ssub.s32 %s29, 2
      %s42 = sadd.s32 1, %s37
      %p43 = scmp.ge.s32.totalorder %s42, 7
      %s44 = scalar_select %p43, 0, %s42
      %s45 = sadd.s32 1, %s36
      %s46 = scalar_select %p43, %s45, %s36
      %p47 = scmp.ge.s32.totalorder %s46, 3
      %s48 = scalar_select %p47, 0, %s46
      %s49 = sld [smem:[#allocation7 + %s37]]
      %s50 = sld [smem:[#allocation8 + %s37]]
      %s51 = sld [smem:[#allocation7 + %s44]]
      %s52 = sld [smem:[#allocation8 + %s44]]
      %s53 = ssub.s32 %s49, %s51
      %s54 = ssub.s32 %s50, %s52
      %s55 = sor.u32 %s53, %s54
      %p56 = scmp.eq.s32.totalorder %s55, 0
      %s58 = sadd.s32 %s57, 1
      %s59 = scalar_select %p56, %s57, %s58
      %p62 = pneg %p56
      %p63 = scmp.eq.s32.totalorder %s29, 20
      %p64 = por %p62, %p63
      %p65 = scmp.ne.s32.totalorder %s57, %s60
      %p66 = scmp.eq.s32.totalorder %s29, 0
      %p67 = por %p65, %p66
      %p68 = scmp.ne.s32.totalorder %s57, %s60
      %p69 = scmp.eq.s32.totalorder %s34, 20
      %p70 = por %p68, %p69
      %p71 = scmp.ne.s32.totalorder %s60, %s61
      %p72 = scmp.eq.s32.totalorder %s34, 0
      %p73 = por %p71, %p72
      %p74 = scmp.ne.s32.totalorder %s60, %s61
      %p75 = scmp.eq.s32.totalorder %s35, 20
      %p76 = por %p74, %p75
      %p78 = scmp.ne.s32.totalorder %s61, %s77
      %p79 = scmp.eq.s32.totalorder %s35, 0
      %p80 = por %p78, %p79
      %s81 = sld [smem:[#allocation7 + %s37]]
      %s82 = sld [smem:[#allocation7 + %s44]]
      %s83 = ssub.s32 %s81, %s82
      %p84 = scmp.eq.s32.totalorder %s83, 0
      %s86 = sadd.s32 %s85, 1
      %s87 = scalar_select %p84, %s85, %s86
      %p90 = pneg %p84
      %p91 = scmp.eq.s32.totalorder %s29, 20
      %p92 = por %p90, %p91
      %p93 = scmp.ne.s32.totalorder %s85, %s88
      %p94 = scmp.eq.s32.totalorder %s29, 0
      %p95 = por %p93, %p94
      %p96 = scmp.ne.s32.totalorder %s85, %s88
      %p97 = scmp.eq.s32.totalorder %s34, 20
      %p98 = por %p96, %p97
      %p99 = scmp.ne.s32.totalorder %s88, %s89
      %p100 = scmp.eq.s32.totalorder %s34, 0
      %p101 = por %p99, %p100
      %p102 = scmp.ne.s32.totalorder %s88, %s89
      %p103 = scmp.eq.s32.totalorder %s35, 20
      %p104 = por %p102, %p103
      %p106 = scmp.ne.s32.totalorder %s89, %s105
      %p107 = scmp.eq.s32.totalorder %s35, 0
      %p108 = por %p106, %p107
      %p109 = scmp.le.s32.totalorder 1, %s29
      %p110 = scmp.lt.s32.totalorder %s29, 22
      %p111 = pnand %p109, %p110
      %p112 = pneg %p111
      // Predicated region
      $region9: #{tpu_custom_call.1} parent=5 // pred_check
        _
      $region10: #{tpu_custom_call.1} parent=5 // pred_check_branch
        %114 = sbr.rel (%p111) target = $region12
      $region11: #{tpu_custom_call.1} parent=5 // pred_region
        %s115 = ssub.s32 %s29, 1
      $region12: #{tpu_custom_call.1} parent=5 // pred_fallthru
        _
      %p116 = scmp.lt.s32.totalorder %s29, 21
      // Predicated region
      $region13: #{tpu_custom_call.1} parent=5 // pred_check
        %p117 = pneg %p116
      $region14: #{tpu_custom_call.1} parent=5 // pred_check_branch
        %119 = sbr.rel (%p117) target = $region16
      $region15: #{tpu_custom_call.1} parent=5 // pred_region
        // Predicated region
        $region17: #{tpu_custom_call.1} parent=15 // pred_check
          %p120 = pneg %p67
        $region18: #{tpu_custom_call.1} parent=15 // pred_check_branch
          %122 = sbr.rel (%p120) target = $region20
        $region19: #{tpu_custom_call.1} parent=15 // pred_region
          %s123 = sand.u32 %s57, 1
          %s124 = scalar_lea.sflag [#allocation11], %s123
          %s125 = sand.u32 %s57, 1
          %s126 = smul.addr %s125, 64
          %s127 = scalar_lea.vmem [#allocation10], %s126
          %s128 = sld [smem:[#allocation7 + %s37]]
          %s129 = sld [smem:[#allocation8 + %s37]]
          %s130 = smul.u32 16, %s128
          %s132 = ssub.s32 1024, 1024
          %133 = vsyncadd %s124, %s132
          %s134 = smul.addr %s130, 3
          %s135 = sadd.s32 %s129, %s134
          %s136 = smul.addr %s135, 64
          %s137 = scalar_lea.hbm %s4, %s136
          %s138 = sshll.u32 %s127, 4
          %s139 = int_to_ptr.vmem [resolvable:$true] %s138
          %144 = dma.hbm_to_vmem [thread:$0]  %s137, 1024, %s139, %s124, 192, 64, 4
        $region20: #{tpu_custom_call.1} parent=15 // pred_fallthru
          _
      $region16: #{tpu_custom_call.1} parent=5 // pred_fallthru
        _
      %p145 = scmp.le.s32.totalorder 1, %s29
      %p146 = scmp.lt.s32.totalorder %s29, 22
      %p147 = pnand %p145, %p146
      %p148 = pneg %p147
      // Predicated region
      $region21: #{tpu_custom_call.1} parent=5 // pred_check
        _
      $region22: #{tpu_custom_call.1} parent=5 // pred_check_branch
        %150 = sbr.rel (%p147) target = $region24
      $region23: #{tpu_custom_call.1} parent=5 // pred_region
        %s151 = ssub.s32 %s29, 1
        %s152 = sand.u32 %s60, 1
        %s153 = scalar_lea.sflag [#allocation11], %s152
        %s154 = sand.u32 %s60, 1
        %s155 = smul.addr %s154, 64
        %s156 = scalar_lea.vmem [#allocation10], %s155
        // Predicated region
        $region25: #{tpu_custom_call.1} parent=23 // pred_check
          %p157 = pneg %p73
        $region26: #{tpu_custom_call.1} parent=23 // pred_check_branch
          %159 = sbr.rel (%p157) target = $region28
        $region27: #{tpu_custom_call.1} parent=23 // pred_region
          %160 = dma.done %s153, 1024
        $region28: #{tpu_custom_call.1} parent=23 // pred_fallthru
          _
        %s161 = sand.u32 %s60, 1
        %s162 = scalar_lea.sflag [#allocation11], %s161
        %s163 = sand.u32 %s60, 1
        %s164 = smul.addr %s163, 64
        %s165 = scalar_lea.vmem [#allocation10], %s164
        %p166 = pneg %p73
        %p167 = pneg %p70
        %p168 = pneg %p101
        %p169 = pneg %p98
        %s170 = sand.u32 %s88, 1
        %s171 = scalar_lea.sflag [#allocation12], %s170
        %s172 = sand.u32 %s88, 1
        %s173 = smul.addr %s172, 128
        %s174 = scalar_lea.vmem [#allocation13], %s173
        %s175 = sld [smem:[#allocation7 + %s39]]
        %s176 = sld [smem:[#allocation8 + %s39]]
        %s177 = smul.u32 16, %s175
        %s178 = sld [smem:[#allocation7 + %s39]]
        %s179 = smul.u32 16, %s178
        %s181 = sld [smem:[#allocation9 + %s39]]
        %s182 = sand.u32 %s181, 1
        %p183 = scmp.ne.s32.totalorder %s182, 0
        %s184 = sand.u32 %s181, 2
        %p185 = scmp.ne.s32.totalorder %s184, 0
        %s186 = sand.u32 %s181, 4
        %p187 = scmp.ne.s32.totalorder %s186, 0
        %p188 = scmp.lt.s32.totalorder %s38, 0
        %s189 = ssub.s32 0, %s38
        %s190 = scalar_select %p188, %s189, %s38
        %s191 = sand.u32 %s190, 1
        %s192 = ssub.s32 0, %s191
        %s193 = scalar_select %p188, %s192, %s191
        %p194 = scmp.ne.s32.totalorder %s193, 0
        %p195 = scmp.lt.s32.totalorder %s193, 0
        %p196 = pnand %p195, %p194
        %p197 = pneg %p196
        %s198 = sadd.s32 %s193, 2
        %s199 = scalar_select %p197, %s198, %s193
        %s200 = smul.u32 %s199, 384
        %s201 = sadd.s32 %s38, 1
        %p202 = scmp.lt.s32.totalorder %s201, 0
        %s203 = ssub.s32 0, %s201
        %s204 = scalar_select %p202, %s203, %s201
        %s205 = sand.u32 %s204, 1
        %s206 = ssub.s32 0, %s205
        %s207 = scalar_select %p202, %s206, %s205
        %p208 = scmp.ne.s32.totalorder %s207, 0
        %p209 = scmp.lt.s32.totalorder %s207, 0
        %p210 = pnand %p209, %p208
        %p211 = pneg %p210
        %s212 = sadd.s32 %s207, 2
        %s213 = scalar_select %p211, %s212, %s207
        %s214 = smul.u32 %s213, 384
        %p215 = scmp.eq.s32.totalorder %s38, 0
        %p216 = scmp.eq.s32.totalorder %s39, 0
        %p217 = pnand %p215, %p216
        %p218 = pneg %p217
        // Predicated region
        $region29: #{tpu_custom_call.1} parent=23 // pred_check
          _
        $region30: #{tpu_custom_call.1} parent=23 // pred_check_branch
          %220 = sbr.rel (%p217) target = $region32
        $region31: #{tpu_custom_call.1} parent=23 // pred_region
          // Predicated region
          $region33: #{tpu_custom_call.1} parent=31 // pred_check
            _
          $region34: #{tpu_custom_call.1} parent=31 // pred_check_branch
            %222 = sbr.rel target = $region36
          $region35: #{tpu_custom_call.1} parent=31 // pred_region
            %223 = sst [smem:[#allocation16]] [#allocation15]
            %224 = sst [smem:[#allocation17]] [#allocation14]
          $region36: #{tpu_custom_call.1} parent=31 // pred_fallthru
            _
          %226 = shalt.err (0)
          %s228 = sshll.u32 [#allocation2], 4
          %s229 = int_to_ptr.vmem [resolvable:$true] %s228
          %231 = dma.hbm_to_vmem [thread:$0]  %s3, 3072, %s229, [#allocation5]
          %s232 = smul.u32 4, 48
          %s233 = smul.u32 %s232, 1
          %s234 = sshll.u32 %s233, 4
          %235 = dma.done [#allocation5], %s234
          %v236 = vld [vmem:[#allocation2] sm:$0xff]
          %v237 = vld [vmem:[#allocation2 + $0x8] sm:$0xff]
          %v238 = vld [vmem:[#allocation2 + $0x10] sm:$0xff]
          %v239 = vld [vmem:[#allocation2 + $0x18] sm:$0xff]
          %v240 = vld [vmem:[#allocation2 + $0x20] sm:$0xff]
          %v241 = vld [vmem:[#allocation2 + $0x28] sm:$0xff]
          %v242 = vld [vmem:[#allocation2 + $0x30] sm:$0xff]
          %v243 = vld [vmem:[#allocation2 + $0x38] sm:$0xff]
          %v244 = vld [vmem:[#allocation2 + $0x40] sm:$0xff]
          %v245 = vld [vmem:[#allocation2 + $0x48] sm:$0xff]
          %v246 = vld [vmem:[#allocation2 + $0x50] sm:$0xff]
          %v247 = vld [vmem:[#allocation2 + $0x58] sm:$0xff]
          %v248 = vld [vmem:[#allocation2 + $0x60] sm:$0xff]
          %v249 = vld [vmem:[#allocation2 + $0x68] sm:$0xff]
          %v250 = vld [vmem:[#allocation2 + $0x70] sm:$0xff]
          %v251 = vld [vmem:[#allocation2 + $0x78] sm:$0xff]
          %v252 = vld [vmem:[#allocation2 + $0x80] sm:$0xff]
          %v253 = vld [vmem:[#allocation2 + $0x88] sm:$0xff]
          %v254 = vld [vmem:[#allocation2 + $0x90] sm:$0xff]
          %v255 = vld [vmem:[#allocation2 + $0x98] sm:$0xff]
          %v256 = vld [vmem:[#allocation2 + $0xa0] sm:$0xff]
          %v257 = vld [vmem:[#allocation2 + $0xa8] sm:$0xff]
          %v258 = vld [vmem:[#allocation2 + $0xb0] sm:$0xff]
          %v259 = vld [vmem:[#allocation2 + $0xb8] sm:$0xff]
          %v260 = vunpack.c.l.bf16 %v236
          %v261 = vunpack.c.h.bf16 %v236
          %v262 = vunpack.c.l.bf16 %v237
          %v263 = vunpack.c.h.bf16 %v237
          %v264 = vunpack.c.l.bf16 %v238
          %v265 = vunpack.c.h.bf16 %v238
          %v266 = vunpack.c.l.bf16 %v239
          %v267 = vunpack.c.h.bf16 %v239
          %v268 = vunpack.c.l.bf16 %v240
          %v269 = vunpack.c.h.bf16 %v240
          %v270 = vunpack.c.l.bf16 %v241
          %v271 = vunpack.c.h.bf16 %v241
          %v272 = vunpack.c.l.bf16 %v242
          %v273 = vunpack.c.h.bf16 %v242
          %v274 = vunpack.c.l.bf16 %v243
          %v275 = vunpack.c.h.bf16 %v243
          %v276 = vunpack.c.l.bf16 %v244
          %v277 = vunpack.c.h.bf16 %v244
          %v278 = vunpack.c.l.bf16 %v245
          %v279 = vunpack.c.h.bf16 %v245
          %v280 = vunpack.c.l.bf16 %v246
          %v281 = vunpack.c.h.bf16 %v246
          %v282 = vunpack.c.l.bf16 %v247
          %v283 = vunpack.c.h.bf16 %v247
          %v284 = vunpack.c.l.bf16 %v248
          %v285 = vunpack.c.h.bf16 %v248
          %v286 = vunpack.c.l.bf16 %v249
          %v287 = vunpack.c.h.bf16 %v249
          %v288 = vunpack.c.l.bf16 %v250
          %v289 = vunpack.c.h.bf16 %v250
          %v290 = vunpack.c.l.bf16 %v251
          %v291 = vunpack.c.h.bf16 %v251
          %v292 = vunpack.c.l.bf16 %v252
          %v293 = vunpack.c.h.bf16 %v252
          %v294 = vunpack.c.l.bf16 %v253
          %v295 = vunpack.c.h.bf16 %v253
          %v296 = vunpack.c.l.bf16 %v254
          %v297 = vunpack.c.h.bf16 %v254
          %v298 = vunpack.c.l.bf16 %v255
          %v299 = vunpack.c.h.bf16 %v255
          %v300 = vunpack.c.l.bf16 %v256
          %v301 = vunpack.c.h.bf16 %v256
          %v302 = vunpack.c.l.bf16 %v257
          %v303 = vunpack.c.h.bf16 %v257
          %v304 = vunpack.c.l.bf16 %v258
          %v305 = vunpack.c.h.bf16 %v258
          %v306 = vunpack.c.l.bf16 %v259
          %v307 = vunpack.c.h.bf16 %v259
          %v308 = vmul.f32 %v260, 0.25
          %v309 = vmul.f32 %v261, 0.25
          %v310 = vmul.f32 %v262, 0.25
          %v311 = vmul.f32 %v263, 0.25
          %v312 = vmul.f32 %v264, 0.25
          %v313 = vmul.f32 %v265, 0.25
          %v314 = vmul.f32 %v266, 0.25
          %v315 = vmul.f32 %v267, 0.25
          %v316 = vmul.f32 %v268, 0.25
          %v317 = vmul.f32 %v269, 0.25
          %v318 = vmul.f32 %v270, 0.25
          %v319 = vmul.f32 %v271, 0.25
          %v320 = vmul.f32 %v272, 0.25
          %v321 = vmul.f32 %v273, 0.25
          %v322 = vmul.f32 %v274, 0.25
          %v323 = vmul.f32 %v275, 0.25
          %v324 = vmul.f32 %v276, 0.25
          %v325 = vmul.f32 %v277, 0.25
          %v326 = vmul.f32 %v278, 0.25
          %v327 = vmul.f32 %v279, 0.25
          %v328 = vmul.f32 %v280, 0.25
          %v329 = vmul.f32 %v281, 0.25
          %v330 = vmul.f32 %v282, 0.25
          %v331 = vmul.f32 %v283, 0.25
          %v332 = vmul.f32 %v284, 0.25
          %v333 = vmul.f32 %v285, 0.25
          %v334 = vmul.f32 %v286, 0.25
          %v335 = vmul.f32 %v287, 0.25
          %v336 = vmul.f32 %v288, 0.25
          %v337 = vmul.f32 %v289, 0.25
          %v338 = vmul.f32 %v290, 0.25
          %v339 = vmul.f32 %v291, 0.25
          %v340 = vmul.f32 %v292, 0.25
          %v341 = vmul.f32 %v293, 0.25
          %v342 = vmul.f32 %v294, 0.25
          %v343 = vmul.f32 %v295, 0.25
          %v344 = vmul.f32 %v296, 0.25
          %v345 = vmul.f32 %v297, 0.25
          %v346 = vmul.f32 %v298, 0.25
          %v347 = vmul.f32 %v299, 0.25
          %v348 = vmul.f32 %v300, 0.25
          %v349 = vmul.f32 %v301, 0.25
          %v350 = vmul.f32 %v302, 0.25
          %v351 = vmul.f32 %v303, 0.25
          %v352 = vmul.f32 %v304, 0.25
          %v353 = vmul.f32 %v305, 0.25
          %v354 = vmul.f32 %v306, 0.25
          %v355 = vmul.f32 %v307, 0.25
          %356 = vst [vmem:[#allocation3] sm:$0xff] %v308
          %357 = vst [vmem:[#allocation3 + $0x8] sm:$0xff] %v309
          %358 = vst [vmem:[#allocation3 + $0x10] sm:$0xff] %v310
          %359 = vst [vmem:[#allocation3 + $0x18] sm:$0xff] %v311
          %360 = vst [vmem:[#allocation3 + $0x20] sm:$0xff] %v312
          %361 = vst [vmem:[#allocation3 + $0x28] sm:$0xff] %v313
          %362 = vst [vmem:[#allocation3 + $0x30] sm:$0xff] %v314
          %363 = vst [vmem:[#allocation3 + $0x38] sm:$0xff] %v315
          %364 = vst [vmem:[#allocation3 + $0x40] sm:$0xff] %v316
          %365 = vst [vmem:[#allocation3 + $0x48] sm:$0xff] %v317
          %366 = vst [vmem:[#allocation3 + $0x50] sm:$0xff] %v318
          %367 = vst [vmem:[#allocation3 + $0x58] sm:$0xff] %v319
          %368 = vst [vmem:[#allocation3 + $0x60] sm:$0xff] %v320
          %369 = vst [vmem:[#allocation3 + $0x68] sm:$0xff] %v321
          %370 = vst [vmem:[#allocation3 + $0x70] sm:$0xff] %v322
          %371 = vst [vmem:[#allocation3 + $0x78] sm:$0xff] %v323
          %372 = vst [vmem:[#allocation3 + $0x80] sm:$0xff] %v324
          %373 = vst [vmem:[#allocation3 + $0x88] sm:$0xff] %v325
          %374 = vst [vmem:[#allocation3 + $0x90] sm:$0xff] %v326
          %375 = vst [vmem:[#allocation3 + $0x98] sm:$0xff] %v327
          %376 = vst [vmem:[#allocation3 + $0xa0] sm:$0xff] %v328
          %377 = vst [vmem:[#allocation3 + $0xa8] sm:$0xff] %v329
          %378 = vst [vmem:[#allocation3 + $0xb0] sm:$0xff] %v330
          %379 = vst [vmem:[#allocation3 + $0xb8] sm:$0xff] %v331
          %380 = vst [vmem:[#allocation3 + $0xc0] sm:$0xff] %v332
          %381 = vst [vmem:[#allocation3 + $0xc8] sm:$0xff] %v333
          %382 = vst [vmem:[#allocation3 + $0xd0] sm:$0xff] %v334
          %383 = vst [vmem:[#allocation3 + $0xd8] sm:$0xff] %v335
          %384 = vst [vmem:[#allocation3 + $0xe0] sm:$0xff] %v336
          %385 = vst [vmem:[#allocation3 + $0xe8] sm:$0xff] %v337
          %386 = vst [vmem:[#allocation3 + $0xf0] sm:$0xff] %v338
          %387 = vst [vmem:[#allocation3 + $0xf8] sm:$0xff] %v339
          %388 = vst [vmem:[#allocation3 + $0x100] sm:$0xff] %v340
          %389 = vst [vmem:[#allocation3 + $0x108] sm:$0xff] %v341
          %390 = vst [vmem:[#allocation3 + $0x110] sm:$0xff] %v342
          %391 = vst [vmem:[#allocation3 + $0x118] sm:$0xff] %v343
          %392 = vst [vmem:[#allocation3 + $0x120] sm:$0xff] %v344
          %393 = vst [vmem:[#allocation3 + $0x128] sm:$0xff] %v345
          %394 = vst [vmem:[#allocation3 + $0x130] sm:$0xff] %v346
          %395 = vst [vmem:[#allocation3 + $0x138] sm:$0xff] %v347
          %396 = vst [vmem:[#allocation3 + $0x140] sm:$0xff] %v348
          %397 = vst [vmem:[#allocation3 + $0x148] sm:$0xff] %v349
          %398 = vst [vmem:[#allocation3 + $0x150] sm:$0xff] %v350
          %399 = vst [vmem:[#allocation3 + $0x158] sm:$0xff] %v351
          %400 = vst [vmem:[#allocation3 + $0x160] sm:$0xff] %v352
          %401 = vst [vmem:[#allocation3 + $0x168] sm:$0xff] %v353
          %402 = vst [vmem:[#allocation3 + $0x170] sm:$0xff] %v354
          %403 = vst [vmem:[#allocation3 + $0x178] sm:$0xff] %v355
        $region32: #{tpu_custom_call.1} parent=23 // pred_fallthru
          _
        // Predicated region
        $region37: #{tpu_custom_call.1} parent=23 // pred_check
          %p404 = pneg %p183
        $region38: #{tpu_custom_call.1} parent=23 // pred_check_branch
          %406 = sbr.rel (%p404) target = $region40
        $region39: #{tpu_custom_call.1} parent=23 // pred_region
          %407 = vst [vmem:[#allocation4] sm:$0xff] 0.0
          %408 = vst [vmem:[#allocation4 + $0x8] sm:$0xff] 0.0
          %409 = vst [vmem:[#allocation4 + $0x10] sm:$0xff] 0.0
          %410 = vst [vmem:[#allocation4 + $0x18] sm:$0xff] 0.0
          %411 = vst [vmem:[#allocation4 + $0x20] sm:$0xff] 0.0
          %412 = vst [vmem:[#allocation4 + $0x28] sm:$0xff] 0.0
          %413 = vst [vmem:[#allocation4 + $0x30] sm:$0xff] 0.0
          %414 = vst [vmem:[#allocation4 + $0x38] sm:$0xff] 0.0
          %415 = vst [vmem:[#allocation4 + $0x40] sm:$0xff] 0.0
          %416 = vst [vmem:[#allocation4 + $0x48] sm:$0xff] 0.0
          %417 = vst [vmem:[#allocation4 + $0x50] sm:$0xff] 0.0
          %418 = vst [vmem:[#allocation4 + $0x58] sm:$0xff] 0.0
          %419 = vst [vmem:[#allocation4 + $0x60] sm:$0xff] 0.0
          %420 = vst [vmem:[#allocation4 + $0x68] sm:$0xff] 0.0
          %421 = vst [vmem:[#allocation4 + $0x70] sm:$0xff] 0.0
          %422 = vst [vmem:[#allocation4 + $0x78] sm:$0xff] 0.0
        $region40: #{tpu_custom_call.1} parent=23 // pred_fallthru
          _
        // Predicated region
        $region41: #{tpu_custom_call.1} parent=23 // pred_check
          %p423 = pneg %p187
        $region42: #{tpu_custom_call.1} parent=23 // pred_check_branch
          %425 = sbr.rel (%p423) target = $region44
        $region43: #{tpu_custom_call.1} parent=23 // pred_region
          %s426 = sld [smem:[#allocation8 + %s39]]
          %s427 = smul.u32 %s426, 128
          %s428 = sadd.s32 %s200, %s427
          %v429 = vld [vmem:[#allocation4] sm:$0xff]
          %v430 = vld [vmem:[#allocation4 + $0x8] sm:$0xff]
          %v431 = vld [vmem:[#allocation4 + $0x10] sm:$0xff]
          %v432 = vld [vmem:[#allocation4 + $0x18] sm:$0xff]
          %v433 = vld [vmem:[#allocation4 + $0x20] sm:$0xff]
          %v434 = vld [vmem:[#allocation4 + $0x28] sm:$0xff]
          %v435 = vld [vmem:[#allocation4 + $0x30] sm:$0xff]
          %v436 = vld [vmem:[#allocation4 + $0x38] sm:$0xff]
          %v437 = vld [vmem:[#allocation4 + $0x40] sm:$0xff]
          %v438 = vld [vmem:[#allocation4 + $0x48] sm:$0xff]
          %v439 = vld [vmem:[#allocation4 + $0x50] sm:$0xff]
          %v440 = vld [vmem:[#allocation4 + $0x58] sm:$0xff]
          %v441 = vld [vmem:[#allocation4 + $0x60] sm:$0xff]
          %v442 = vld [vmem:[#allocation4 + $0x68] sm:$0xff]
          %v443 = vld [vmem:[#allocation4 + $0x70] sm:$0xff]
          %v444 = vld [vmem:[#allocation4 + $0x78] sm:$0xff]
          %v445 = vld [vmem:[%s156] sm:$0xf]
          %v446 = vld [vmem:[%s156 + $0x4] sm:$0xf]
          %v447 = vld [vmem:[%s156 + $0x8] sm:$0xf]
          %v448 = vld [vmem:[%s156 + $0xc] sm:$0xf]
          %v449 = vld [vmem:[%s156 + $0x10] sm:$0xf]
          %v450 = vld [vmem:[%s156 + $0x14] sm:$0xf]
          %v451 = vld [vmem:[%s156 + $0x18] sm:$0xf]
          %v452 = vld [vmem:[%s156 + $0x1c] sm:$0xf]
          %v453 = vld [vmem:[%s156 + $0x20] sm:$0xf]
          %v454 = vld [vmem:[%s156 + $0x24] sm:$0xf]
          %v455 = vld [vmem:[%s156 + $0x28] sm:$0xf]
          %v456 = vld [vmem:[%s156 + $0x2c] sm:$0xf]
          %v457 = vld [vmem:[%s156 + $0x30] sm:$0xf]
          %v458 = vld [vmem:[%s156 + $0x34] sm:$0xf]
          %v459 = vld [vmem:[%s156 + $0x38] sm:$0xf]
          %v460 = vld [vmem:[%s156 + $0x3c] sm:$0xf]
          %s461 = sshra.s32 %s428, 4
          %s462 = sand.u32 %s428, 15
          %s463 = smul.addr %s461, 8
          %s464 = scalar_lea.vmem [#allocation2], %s463
          %v465 = vld [vmem:[%s464] sm:$0xff]
          %v466 = vld [vmem:[%s464 + $0x8] sm:$0xff]
          %v467 = vld [vmem:[%s464 + $0x10] sm:$0xff]
          %v468 = vld [vmem:[%s464 + $0x18] sm:$0xff]
          %v469 = vld [vmem:[%s464 + $0x20] sm:$0xff]
          %v470 = vld [vmem:[%s464 + $0x28] sm:$0xff]
          %v471 = vld [vmem:[%s464 + $0x30] sm:$0xff]
          %v472 = vld [vmem:[%s464 + $0x38] sm:$0xff]
          %v489 = vunpack.c.l.b16 %v445
          %v490 = vunpack.c.l.b16 %v446
          %v491 = vunpack.c.l.b16 %v447
          %v492 = vunpack.c.l.b16 %v448
          %v493 = vunpack.c.l.b16 %v449
          %v494 = vunpack.c.l.b16 %v450
          %v495 = vunpack.c.l.b16 %v451
          %v496 = vunpack.c.l.b16 %v452
          %v497 = vunpack.c.l.b16 %v453
          %v498 = vunpack.c.l.b16 %v454
          %v499 = vunpack.c.l.b16 %v455
          %v500 = vunpack.c.l.b16 %v456
          %v501 = vunpack.c.l.b16 %v457
          %v502 = vunpack.c.l.b16 %v458
          %v503 = vunpack.c.l.b16 %v459
          %v504 = vunpack.c.l.b16 %v460
          %v505 = vpack.c.b16 %v490, %v489
          %v506 = vpack.c.b16 %v492, %v491
          %v507 = vpack.c.b16 %v494, %v493
          %v508 = vpack.c.b16 %v496, %v495
          %v509 = vpack.c.b16 %v498, %v497
          %v510 = vpack.c.b16 %v500, %v499
          %v511 = vpack.c.b16 %v502, %v501
          %v512 = vpack.c.b16 %v504, %v503
          %521 = vmatprep.subr.bf16.mxu0 0
          %522 = vmatpush1.bf16.msra.mxu0 %v465
          %523 = vmatprep.subr.bf16.mxu0 0
          %524 = vmatpush1.bf16.msra.mxu0 %v466
          %525 = vmatprep.subr.bf16.mxu0 0
          %526 = vmatpush1.bf16.msra.mxu0 %v467
          %527 = vmatprep.subr.bf16.mxu0 0
          %528 = vmatpush1.bf16.msra.mxu0 %v468
          %529 = vmatprep.subr.bf16.mxu0 0
          %530 = vmatpush1.bf16.msra.mxu0 %v469
          %531 = vmatprep.subr.bf16.mxu0 0
          %532 = vmatpush1.bf16.msra.mxu0 %v470
          %533 = vmatprep.subr.bf16.mxu0 0
          %534 = vmatpush1.bf16.msra.mxu0 %v471
          %535 = vmatprep.subr.bf16.mxu0 0
          %536 = vmatpush1.bf16.msra.mxu0 %v472
          %537 = vmatprep.subr.bf16.mxu0 0
          %538 = vmatpush1.bf16.msra.mxu0 0
          %539 = vmatprep.subr.bf16.mxu0 0
          %540 = vmatpush1.bf16.msra.mxu0 0
          %541 = vmatprep.subr.bf16.mxu0 0
          %542 = vmatpush1.bf16.msra.mxu0 0
          %543 = vmatprep.subr.bf16.mxu0 0
          %544 = vmatpush1.bf16.msra.mxu0 0
          %545 = vmatprep.subr.bf16.mxu0 0
          %546 = vmatpush1.bf16.msra.mxu0 0
          %547 = vmatprep.subr.bf16.mxu0 0
          %548 = vmatpush1.bf16.msra.mxu0 0
          %549 = vmatprep.subr.bf16.mxu0 0
          %550 = vmatpush1.bf16.msra.mxu0 0
          %551 = vmatprep.subr.bf16.mxu0 0
          %552 = vmatpush1.bf16.msra.mxu0 0
          %553 = vmatprep.mubr.bf16.mxu0 0
          %554 = vmatmul.mubr.bf16.gmra.mrb[0].mxu0 %v505
          %v555 = vpop.f32.mrb[0].mxu0
          %v556 = vadd.f32 0.0, %v555
          %v557 = vpop.f32.mrb[0].mxu0
          %v558 = vpop.f32.mrb[0].mxu0
          %v559 = vadd.f32 0.0, %v558
          %v560 = vpop.f32.mrb[0].mxu0
          %561 = vmatprep.mubr.bf16.mxu0 0
          %562 = vmatmul.mubr.bf16.gmra.mrb[0].mxu0 %v506
          %v563 = vpop.f32.mrb[0].mxu0
          %v564 = vadd.f32 0.0, %v563
          %v565 = vpop.f32.mrb[0].mxu0
          %v566 = vpop.f32.mrb[0].mxu0
          %v567 = vadd.f32 0.0, %v566
          %v568 = vpop.f32.mrb[0].mxu0
          %569 = vmatprep.mubr.bf16.mxu0 0
          %570 = vmatmul.mubr.bf16.gmra.mrb[0].mxu0 %v507
          %v571 = vpop.f32.mrb[0].mxu0
          %v572 = vadd.f32 0.0, %v571
          %v573 = vpop.f32.mrb[0].mxu0
          %v574 = vpop.f32.mrb[0].mxu0
          %v575 = vadd.f32 0.0, %v574
          %v576 = vpop.f32.mrb[0].mxu0
          %577 = vmatprep.mubr.bf16.mxu0 0
          %578 = vmatmul.mubr.bf16.gmra.mrb[0].mxu0 %v508
          %v579 = vpop.f32.mrb[0].mxu0
          %v580 = vadd.f32 0.0, %v579
          %v581 = vpop.f32.mrb[0].mxu0
          %v582 = vpop.f32.mrb[0].mxu0
          %v583 = vadd.f32 0.0, %v582
          %v584 = vpop.f32.mrb[0].mxu0
          %585 = vmatprep.mubr.bf16.mxu0 0
          %586 = vmatmul.mubr.bf16.gmra.mrb[0].mxu0 %v509
          %v587 = vpop.f32.mrb[0].mxu0
          %v588 = vadd.f32 0.0, %v587
          %v589 = vpop.f32.mrb[0].mxu0
          %v590 = vpop.f32.mrb[0].mxu0
          %v591 = vadd.f32 0.0, %v590
          %v592 = vpop.f32.mrb[0].mxu0
          %593 = vmatprep.mubr.bf16.mxu0 0
          %594 = vmatmul.mubr.bf16.gmra.mrb[0].mxu0 %v510
          %v595 = vpop.f32.mrb[0].mxu0
          %v596 = vadd.f32 0.0, %v595
          %v597 = vpop.f32.mrb[0].mxu0
          %v598 = vpop.f32.mrb[0].mxu0
          %v599 = vadd.f32 0.0, %v598
          %v600 = vpop.f32.mrb[0].mxu0
          %601 = vmatprep.mubr.bf16.mxu0 0
          %602 = vmatmul.mubr.bf16.gmra.mrb[0].mxu0 %v511
          %v603 = vpop.f32.mrb[0].mxu0
          %v604 = vadd.f32 0.0, %v603
          %v605 = vpop.f32.mrb[0].mxu0
          %v606 = vpop.f32.mrb[0].mxu0
          %v607 = vadd.f32 0.0, %v606
          %v608 = vpop.f32.mrb[0].mxu0
          %609 = vmatprep.mubr.bf16.mxu0 0
          %610 = vmatmul.mubr.bf16.gmra.mrb[0].mxu0 %v512
          %v611 = vpop.f32.mrb[0].mxu0
          %v612 = vadd.f32 0.0, %v611
          %v613 = vpop.f32.mrb[0].mxu0
          %v614 = vpop.f32.mrb[0].mxu0
          %v615 = vadd.f32 0.0, %v614
          %v616 = vpop.f32.mrb[0].mxu0
          %617 = vdwg.mxu0
          %v618 = vadd.f32 %v429, %v556
          %v619 = vadd.f32 %v430, %v559
          %v620 = vadd.f32 %v431, %v564
          %v621 = vadd.f32 %v432, %v567
          %v622 = vadd.f32 %v433, %v572
          %v623 = vadd.f32 %v434, %v575
          %v624 = vadd.f32 %v435, %v580
          %v625 = vadd.f32 %v436, %v583
          %v626 = vadd.f32 %v437, %v588
          %v627 = vadd.f32 %v438, %v591
          %v628 = vadd.f32 %v439, %v596
          %v629 = vadd.f32 %v440, %v599
          %v630 = vadd.f32 %v441, %v604
          %v631 = vadd.f32 %v442, %v607
          %v632 = vadd.f32 %v443, %v612
          %v633 = vadd.f32 %v444, %v615
          %634 = vst [vmem:[#allocation4] sm:$0xff] %v618
          %635 = vst [vmem:[#allocation4 + $0x8] sm:$0xff] %v619
          %636 = vst [vmem:[#allocation4 + $0x10] sm:$0xff] %v620
          %637 = vst [vmem:[#allocation4 + $0x18] sm:$0xff] %v621
          %638 = vst [vmem:[#allocation4 + $0x20] sm:$0xff] %v622
          %639 = vst [vmem:[#allocation4 + $0x28] sm:$0xff] %v623
          %640 = vst [vmem:[#allocation4 + $0x30] sm:$0xff] %v624
          %641 = vst [vmem:[#allocation4 + $0x38] sm:$0xff] %v625
          %642 = vst [vmem:[#allocation4 + $0x40] sm:$0xff] %v626
          %643 = vst [vmem:[#allocation4 + $0x48] sm:$0xff] %v627
          %644 = vst [vmem:[#allocation4 + $0x50] sm:$0xff] %v628
          %645 = vst [vmem:[#allocation4 + $0x58] sm:$0xff] %v629
          %646 = vst [vmem:[#allocation4 + $0x60] sm:$0xff] %v630
          %647 = vst [vmem:[#allocation4 + $0x68] sm:$0xff] %v631
          %648 = vst [vmem:[#allocation4 + $0x70] sm:$0xff] %v632
          %649 = vst [vmem:[#allocation4 + $0x78] sm:$0xff] %v633
        $region44: #{tpu_custom_call.1} parent=23 // pred_fallthru
          _
        // Predicated region
        $region45: #{tpu_custom_call.1} parent=23 // pred_check
          %p650 = pneg %p185
        $region46: #{tpu_custom_call.1} parent=23 // pred_check_branch
          %652 = sbr.rel (%p650) target = $region48
        $region47: #{tpu_custom_call.1} parent=23 // pred_region
          %s653 = sld [smem:[#allocation7 + %s39]]
          %s654 = smul.u32 %s653, 128
          %s655 = sadd.s32 %s214, %s654
          %v656 = vld [vmem:[#allocation4] sm:$0xff]
          %v657 = vld [vmem:[#allocation4 + $0x8] sm:$0xff]
          %v658 = vld [vmem:[#allocation4 + $0x10] sm:$0xff]
          %v659 = vld [vmem:[#allocation4 + $0x18] sm:$0xff]
          %v660 = vld [vmem:[#allocation4 + $0x20] sm:$0xff]
          %v661 = vld [vmem:[#allocation4 + $0x28] sm:$0xff]
          %v662 = vld [vmem:[#allocation4 + $0x30] sm:$0xff]
          %v663 = vld [vmem:[#allocation4 + $0x38] sm:$0xff]
          %v664 = vld [vmem:[#allocation4 + $0x40] sm:$0xff]
          %v665 = vld [vmem:[#allocation4 + $0x48] sm:$0xff]
          %v666 = vld [vmem:[#allocation4 + $0x50] sm:$0xff]
          %v667 = vld [vmem:[#allocation4 + $0x58] sm:$0xff]
          %v668 = vld [vmem:[#allocation4 + $0x60] sm:$0xff]
          %v669 = vld [vmem:[#allocation4 + $0x68] sm:$0xff]
          %v670 = vld [vmem:[#allocation4 + $0x70] sm:$0xff]
          %v671 = vld [vmem:[#allocation4 + $0x78] sm:$0xff]
          %v672 = vpack.c.bf16 %v657, %v656
          %v673 = vpack.c.bf16 %v659, %v658
          %v674 = vpack.c.bf16 %v661, %v660
          %v675 = vpack.c.bf16 %v663, %v662
          %v676 = vpack.c.bf16 %v665, %v664
          %v677 = vpack.c.bf16 %v667, %v666
          %v678 = vpack.c.bf16 %v669, %v668
          %v679 = vpack.c.bf16 %v671, %v670
          %s680 = sshra.s32 %s655, 4
          %s681 = sand.u32 %s655, 15
          %s682 = smul.addr %s680, 8
          %s683 = scalar_lea.vmem [#allocation2], %s682
          %684 = vst [vmem:[%s683] sm:$0xff] %v672
          %685 = vst [vmem:[%s683 + $0x8] sm:$0xff] %v673
          %686 = vst [vmem:[%s683 + $0x10] sm:$0xff] %v674
          %687 = vst [vmem:[%s683 + $0x18] sm:$0xff] %v675
          %688 = vst [vmem:[%s683 + $0x20] sm:$0xff] %v676
          %689 = vst [vmem:[%s683 + $0x28] sm:$0xff] %v677
          %690 = vst [vmem:[%s683 + $0x30] sm:$0xff] %v678
          %691 = vst [vmem:[%s683 + $0x38] sm:$0xff] %v679
          %s692 = scalar_lea.vmem [#allocation3], %s654
          %v693 = vld [vmem:[%s692] sm:$0xff]
          %v694 = vld [vmem:[%s692 + $0x8] sm:$0xff]
          %v695 = vld [vmem:[%s692 + $0x10] sm:$0xff]
          %v696 = vld [vmem:[%s692 + $0x18] sm:$0xff]
          %v697 = vld [vmem:[%s692 + $0x20] sm:$0xff]
          %v698 = vld [vmem:[%s692 + $0x28] sm:$0xff]
          %v699 = vld [vmem:[%s692 + $0x30] sm:$0xff]
          %v700 = vld [vmem:[%s692 + $0x38] sm:$0xff]
          %v701 = vld [vmem:[%s692 + $0x40] sm:$0xff]
          %v702 = vld [vmem:[%s692 + $0x48] sm:$0xff]
          %v703 = vld [vmem:[%s692 + $0x50] sm:$0xff]
          %v704 = vld [vmem:[%s692 + $0x58] sm:$0xff]
          %v705 = vld [vmem:[%s692 + $0x60] sm:$0xff]
          %v706 = vld [vmem:[%s692 + $0x68] sm:$0xff]
          %v707 = vld [vmem:[%s692 + $0x70] sm:$0xff]
          %v708 = vld [vmem:[%s692 + $0x78] sm:$0xff]
          %v709 = vld [vmem:[#allocation4] sm:$0xff]
          %v710 = vld [vmem:[#allocation4 + $0x8] sm:$0xff]
          %v711 = vld [vmem:[#allocation4 + $0x10] sm:$0xff]
          %v712 = vld [vmem:[#allocation4 + $0x18] sm:$0xff]
          %v713 = vld [vmem:[#allocation4 + $0x20] sm:$0xff]
          %v714 = vld [vmem:[#allocation4 + $0x28] sm:$0xff]
          %v715 = vld [vmem:[#allocation4 + $0x30] sm:$0xff]
          %v716 = vld [vmem:[#allocation4 + $0x38] sm:$0xff]
          %v717 = vld [vmem:[#allocation4 + $0x40] sm:$0xff]
          %v718 = vld [vmem:[#allocation4 + $0x48] sm:$0xff]
          %v719 = vld [vmem:[#allocation4 + $0x50] sm:$0xff]
          %v720 = vld [vmem:[#allocation4 + $0x58] sm:$0xff]
          %v721 = vld [vmem:[#allocation4 + $0x60] sm:$0xff]
          %v722 = vld [vmem:[#allocation4 + $0x68] sm:$0xff]
          %v723 = vld [vmem:[#allocation4 + $0x70] sm:$0xff]
          %v724 = vld [vmem:[#allocation4 + $0x78] sm:$0xff]
          %v725 = vmul.f32 %v709, 0.25
          %v726 = vmul.f32 %v710, 0.25
          %v727 = vmul.f32 %v711, 0.25
          %v728 = vmul.f32 %v712, 0.25
          %v729 = vmul.f32 %v713, 0.25
          %v730 = vmul.f32 %v714, 0.25
          %v731 = vmul.f32 %v715, 0.25
          %v732 = vmul.f32 %v716, 0.25
          %v733 = vmul.f32 %v717, 0.25
          %v734 = vmul.f32 %v718, 0.25
          %v735 = vmul.f32 %v719, 0.25
          %v736 = vmul.f32 %v720, 0.25
          %v737 = vmul.f32 %v721, 0.25
          %v738 = vmul.f32 %v722, 0.25
          %v739 = vmul.f32 %v723, 0.25
          %v740 = vmul.f32 %v724, 0.25
          %v741 = vadd.f32 %v693, %v725
          %v742 = vadd.f32 %v694, %v726
          %v743 = vadd.f32 %v695, %v727
          %v744 = vadd.f32 %v696, %v728
          %v745 = vadd.f32 %v697, %v729
          %v746 = vadd.f32 %v698, %v730
          %v747 = vadd.f32 %v699, %v731
          %v748 = vadd.f32 %v700, %v732
          %v749 = vadd.f32 %v701, %v733
          %v750 = vadd.f32 %v702, %v734
          %v751 = vadd.f32 %v703, %v735
          %v752 = vadd.f32 %v704, %v736
          %v753 = vadd.f32 %v705, %v737
          %v754 = vadd.f32 %v706, %v738
          %v755 = vadd.f32 %v707, %v739
          %v756 = vadd.f32 %v708, %v740
          %757 = vst [vmem:[%s692] sm:$0xff] %v741
          %758 = vst [vmem:[%s692 + $0x8] sm:$0xff] %v742
          %759 = vst [vmem:[%s692 + $0x10] sm:$0xff] %v743
          %760 = vst [vmem:[%s692 + $0x18] sm:$0xff] %v744
          %761 = vst [vmem:[%s692 + $0x20] sm:$0xff] %v745
          %762 = vst [vmem:[%s692 + $0x28] sm:$0xff] %v746
          %763 = vst [vmem:[%s692 + $0x30] sm:$0xff] %v747
          %764 = vst [vmem:[%s692 + $0x38] sm:$0xff] %v748
          %765 = vst [vmem:[%s692 + $0x40] sm:$0xff] %v749
          %766 = vst [vmem:[%s692 + $0x48] sm:$0xff] %v750
          %767 = vst [vmem:[%s692 + $0x50] sm:$0xff] %v751
          %768 = vst [vmem:[%s692 + $0x58] sm:$0xff] %v752
          %769 = vst [vmem:[%s692 + $0x60] sm:$0xff] %v753
          %770 = vst [vmem:[%s692 + $0x68] sm:$0xff] %v754
          %771 = vst [vmem:[%s692 + $0x70] sm:$0xff] %v755
          %772 = vst [vmem:[%s692 + $0x78] sm:$0xff] %v756
          %773 = vst [vmem:[%s174] sm:$0xff] %v741
          %774 = vst [vmem:[%s174 + $0x8] sm:$0xff] %v742
          %775 = vst [vmem:[%s174 + $0x10] sm:$0xff] %v743
          %776 = vst [vmem:[%s174 + $0x18] sm:$0xff] %v744
          %777 = vst [vmem:[%s174 + $0x20] sm:$0xff] %v745
          %778 = vst [vmem:[%s174 + $0x28] sm:$0xff] %v746
          %779 = vst [vmem:[%s174 + $0x30] sm:$0xff] %v747
          %780 = vst [vmem:[%s174 + $0x38] sm:$0xff] %v748
          %781 = vst [vmem:[%s174 + $0x40] sm:$0xff] %v749
          %782 = vst [vmem:[%s174 + $0x48] sm:$0xff] %v750
          %783 = vst [vmem:[%s174 + $0x50] sm:$0xff] %v751
          %784 = vst [vmem:[%s174 + $0x58] sm:$0xff] %v752
          %785 = vst [vmem:[%s174 + $0x60] sm:$0xff] %v753
          %786 = vst [vmem:[%s174 + $0x68] sm:$0xff] %v754
          %787 = vst [vmem:[%s174 + $0x70] sm:$0xff] %v755
          %788 = vst [vmem:[%s174 + $0x78] sm:$0xff] %v756
        $region48: #{tpu_custom_call.1} parent=23 // pred_fallthru
          _
        %s789 = sand.u32 %s88, 1
        %s790 = scalar_lea.sflag [#allocation12], %s789
        %s791 = sand.u32 %s88, 1
        %s792 = smul.addr %s791, 128
        %s793 = scalar_lea.vmem [#allocation13], %s792
        // Predicated region
        $region49: #{tpu_custom_call.1} parent=23 // pred_check
          %p794 = pneg %p98
        $region50: #{tpu_custom_call.1} parent=23 // pred_check_branch
          %796 = sbr.rel (%p794) target = $region52
        $region51: #{tpu_custom_call.1} parent=23 // pred_region
          %s797 = sld [smem:[#allocation7 + %s39]]
          %s798 = smul.u32 16, %s797
          %s800 = ssub.s32 2048, 2048
          %801 = vsyncadd %s790, %s800
          %s802 = smul.addr %s798, 128
          %s803 = scalar_lea.hbm %s5, %s802
          %s804 = sshll.u32 %s793, 4
          %s805 = int_to_ptr.vmem [resolvable:$true] %s804
          %810 = dma.vmem_to_hbm [thread:$0]  %s805, 2048, %s803, %s790, 128, 128, 8
        $region52: #{tpu_custom_call.1} parent=23 // pred_fallthru
          _
      $region24: #{tpu_custom_call.1} parent=5 // pred_fallthru
        _
      %p811 = scmp.le.s32.totalorder 2, %s29
      // Predicated region
      $region53: #{tpu_custom_call.1} parent=5 // pred_check
        %p812 = pneg %p811
      $region54: #{tpu_custom_call.1} parent=5 // pred_check_branch
        %814 = sbr.rel (%p812) target = $region56
      $region55: #{tpu_custom_call.1} parent=5 // pred_region
        %s815 = ssub.s32 %s29, 2
        // Predicated region
        $region57: #{tpu_custom_call.1} parent=55 // pred_check
          %p816 = pneg %p104
        $region58: #{tpu_custom_call.1} parent=55 // pred_check_branch
          %818 = sbr.rel (%p816) target = $region60
        $region59: #{tpu_custom_call.1} parent=55 // pred_region
          %s819 = sand.u32 %s89, 1
          %s820 = scalar_lea.sflag [#allocation12], %s819
          %s821 = sand.u32 %s89, 1
          %s822 = smul.addr %s821, 128
          %s823 = scalar_lea.vmem [#allocation13], %s822
          %824 = dma.done %s820, 2048
        $region60: #{tpu_custom_call.1} parent=55 // pred_fallthru
          _
      $region56: #{tpu_custom_call.1} parent=5 // pred_fallthru
        _
    $region6: #{tpu_custom_call.1} parent=1 // loop_footer
      %s33 = sadd.s32 1, %s29
    $region7: #{tpu_custom_call.1} parent=1 // loop_footer_branch
      %28 = sbr.rel target = $region3
    $region8: #{tpu_custom_call.1} parent=1 // loop_exit
      _
    %825 = vsyncpa [#allocation11], 1
    %s826 = scalar_lea.sflag [#allocation11], 1
    %827 = vsyncpa %s826, 1
    %828 = vsyncpa [#allocation12], 1
    %s829 = scalar_lea.sflag [#allocation12], 1
    %830 = vsyncpa %s829, 1
  %831 = vsyncmov [#allocation5]
  %s832 = vpop.sfrf %831
  %p833 = scmp.eq.s32.totalorder %s832, 0
  %p834 = pneg %p833
  %836 = shalt.err (%p834)

</llo_original>
